<compile_context>
chip_gen: v6e
topology: v6e:2x2x1
jax: 0.10.0
libtpu: 0.0.40
codegen_flags: <defaults>
</compile_context>

<pallas_src>
import jax
import jax.numpy as jnp
from jax.experimental import pallas as pl
from jax.experimental.pallas import tpu as pltpu


def wen_attn_kernel(w_ref, h_ref, sv_ref, ww_ref, wh_ref, wsv_ref, v_ref, out_ref):
    # w_ref:(TB,Dw) h_ref:(TB,Dh) sv_ref:(TB,Dsv)
    # ww_ref:(Dw,H) wh_ref:(Dh,H) wsv_ref:(Dsv,H) v_ref:(1,H) out_ref:(1,TB)
    #
    # Fused "cat([w, h, sv]) @ Wha" as three accumulating MXU matmuls (f32 acc).
    s = jnp.dot(w_ref[...], ww_ref[...], preferred_element_type=jnp.float32)
    s = s + jnp.dot(h_ref[...], wh_ref[...], preferred_element_type=jnp.float32)
    s = s + jnp.dot(sv_ref[...], wsv_ref[...], preferred_element_type=jnp.float32)

    t = jnp.tanh(s)                                    # (TB, H) f32 — EUP/VPU
    u = t * v_ref[...].astype(jnp.float32)             # (TB, H) — sublane-broadcast of Vha

    # Lane-dense epilogue (no MXU matvec, no masked width-1 stores):
    # XLU transpose puts the batch rows on the lane axis, then a sublane
    # reduction over H gives the (1, TB) score row stored with full-lane vst.
    out_ref[...] = jnp.sum(u.T, axis=0, keepdims=True).astype(out_ref.dtype)


def _round_up(x, m):
    return (x + m - 1) // m * m


def wen_attn(sv_emb, w_i, h_tm1, Wha, Vha, *, max_batch_tile=1024):
    """attn_weights = tanh(cat([w_i, h_tm1, sv_emb], 1) @ Wha) @ Vha -> (B,)"""
    B, Dw = w_i.shape
    Dh = h_tm1.shape[1]
    Dsv = sv_emb.shape[1]
    D = Dw + Dh + Dsv
    H = Wha.shape[1]
    assert Wha.shape[0] == D

    # Batch tile: a single sublane-aligned tile for small B, otherwise fixed
    # lane-friendly 1024-row tiles so the DMA of tile i+1 overlaps compute of
    # tile i. Footprint (3 double-buffered activation tiles + weights) stays
    # far below the v7x 64 MiB / default scoped-VMEM limits.
    if B <= max_batch_tile:
        TB = _round_up(max(B, 8), 8)
    else:
        TB = max_batch_tile                      # multiple of 128 -> lane-dense out blocks
    Bp = _round_up(B, TB)

    def pad_rows(x):
        # Zero-pad the batch so it divides the tile. For production sizes pick
        # B as a multiple of the tile so this is a no-op (no extra HBM pass).
        return x if x.shape[0] == Bp else jnp.pad(x, ((0, Bp - x.shape[0]), (0, 0)))

    w_p, h_p, sv_p = pad_rows(w_i), pad_rows(h_tm1), pad_rows(sv_emb)

    # Split Wha row-wise once (tiny, weight-sized op) so the concat never
    # materializes; Vha enters as a (1, H) row for the VPU weighting.
    Wha_w = Wha[:Dw]
    Wha_h = Wha[Dw:Dw + Dh]
    Wha_sv = Wha[Dw + Dh:]
    v_row = jnp.reshape(Vha, (1, H))

    grid = (Bp // TB,)

    def act_spec(d):
        return pl.BlockSpec((TB, d), lambda i: (i, 0))

    def resident_spec(r, c):
        # Constant block index -> DMA'd once, stays resident across the grid.
        return pl.BlockSpec((r, c), lambda i: (0, 0))

    out = pl.pallas_call(
        wen_attn_kernel,
        out_shape=jax.ShapeDtypeStruct((1, Bp), jnp.float32),
        grid_spec=pltpu.PrefetchScalarGridSpec(
            num_scalar_prefetch=0,
            grid=grid,
            in_specs=[
                act_spec(Dw), act_spec(Dh), act_spec(Dsv),
                resident_spec(Dw, H), resident_spec(Dh, H), resident_spec(Dsv, H),
                resident_spec(1, H),
            ],
            out_specs=pl.BlockSpec((1, TB), lambda i: (0, i)),
        ),
        compiler_params=pltpu.CompilerParams(
            dimension_semantics=("parallel",),   # v7x: shard batch tiles over 2 TCs
        ),
        cost_estimate=pl.CostEstimate(
            flops=2 * Bp * H * (D + 1),
            transcendentals=Bp * H,
            bytes_accessed=4 * (Bp * D + D * H + H + Bp),
        ),
    )(w_p, h_p, sv_p, Wha_w, Wha_h, Wha_sv, v_row)

    return out[0, :B]                            # lane-dense slab -> (B,) scores


if __name__ == "__main__":
    # Small deterministic shapes consistent with the module's forward:
    #   hidden_size = 32 (h_tm1 dim), word-emb dim = 16, sv-emb dim = 16.
    B, Dw, Dh, Dsv, H = 2, 16, 32, 16, 32
    D = Dw + Dh + Dsv

    key = jax.random.PRNGKey(0)
    k_w, k_h, k_sv, k_Wha, k_Vha = jax.random.split(key, 5)

    w_i    = jax.random.normal(k_w,  (B, Dw),  dtype=jnp.float32)
    h_tm1  = jax.random.normal(k_h,  (B, Dh),  dtype=jnp.float32)
    sv_emb = jax.random.normal(k_sv, (B, Dsv), dtype=jnp.float32)

    # TODO(synk): original module never defines Wha/Vha in __init__; init them
    # deterministically here with the intended (D, H) / (H,) shapes.
    Wha = jax.random.normal(k_Wha, (D, H), dtype=jnp.float32) * 0.1
    Vha = jax.random.normal(k_Vha, (H,),   dtype=jnp.float32) * 0.1

    attn = wen_attn(sv_emb, w_i, h_tm1, Wha, Vha)
    jax.block_until_ready(attn)

    # Cross-check against plain-JAX reference of the reconstructed semantics.
    ref = jnp.tanh(jnp.concatenate([w_i, h_tm1, sv_emb], axis=1) @ Wha) @ Vha
    assert attn.shape == (B,)
    assert jnp.allclose(attn, ref, atol=1e-5, rtol=1e-5), (attn, ref)

    print("KERNEL_OK")
</pallas_src>

<mosaic_0001>
module attributes {stable_mosaic.version = 11 : i64} {
  func.func @wen_attn_kernel(%arg0: i32, %arg1: memref<8x16xf32, #tpu.memory_space<vmem>>, %arg2: memref<8x32xf32, #tpu.memory_space<vmem>>, %arg3: memref<8x16xf32, #tpu.memory_space<vmem>>, %arg4: memref<16x32xf32, #tpu.memory_space<vmem>>, %arg5: memref<32x32xf32, #tpu.memory_space<vmem>>, %arg6: memref<16x32xf32, #tpu.memory_space<vmem>>, %arg7: memref<1x32xf32, #tpu.memory_space<vmem>>, %arg8: memref<1x8xf32, #tpu.memory_space<vmem>>) attributes {dimension_semantics = [#tpu.dimension_semantics<parallel>], iteration_bounds = array<i64: 1>, scalar_prefetch = 0 : i64, scratch_operands = 0 : i64, tpu.core_type = #tpu.core_type<tc>, window_params = [{transform_indices = @transform_0, window_bounds = array<i64: 8, 16>}, {transform_indices = @transform_1, window_bounds = array<i64: 8, 32>}, {transform_indices = @transform_2, window_bounds = array<i64: 8, 16>}, {pipeline_mode = #tpu.pipeline_mode<synchronous>, transform_indices = @transform_3, window_bounds = array<i64: 16, 32>}, {pipeline_mode = #tpu.pipeline_mode<synchronous>, transform_indices = @transform_4, window_bounds = array<i64: 32, 32>}, {pipeline_mode = #tpu.pipeline_mode<synchronous>, transform_indices = @transform_5, window_bounds = array<i64: 16, 32>}, {pipeline_mode = #tpu.pipeline_mode<synchronous>, transform_indices = @transform_6, window_bounds = array<i64: 1, 32>}, {transform_indices = @transform_7, window_bounds = array<i64: 1, 8>}]} {
    %c0 = arith.constant 0 : index
    %c0_0 = arith.constant 0 : index
    %0 = vector.load %arg1[%c0, %c0_0] : memref<8x16xf32, #tpu.memory_space<vmem>>, vector<8x16xf32>
    %c0_1 = arith.constant 0 : index
    %c0_2 = arith.constant 0 : index
    %1 = vector.load %arg4[%c0_1, %c0_2] : memref<16x32xf32, #tpu.memory_space<vmem>>, vector<16x32xf32>
    %cst = arith.constant dense<0.000000e+00> : vector<8x32xf32>
    %2 = tpu.matmul %0, %1, %cst {dimension_numbers = #tpu.dot_dimension_numbers<[1], [0], [0], [1], [0, 0, 1, 1], [], []>} : vector<8x16xf32>, vector<16x32xf32>, vector<8x32xf32> -> vector<8x32xf32>
    %c0_3 = arith.constant 0 : index
    %c0_4 = arith.constant 0 : index
    %3 = vector.load %arg2[%c0_3, %c0_4] : memref<8x32xf32, #tpu.memory_space<vmem>>, vector<8x32xf32>
    %c0_5 = arith.constant 0 : index
    %c0_6 = arith.constant 0 : index
    %4 = vector.load %arg5[%c0_5, %c0_6] : memref<32x32xf32, #tpu.memory_space<vmem>>, vector<32x32xf32>
    %cst_7 = arith.constant dense<0.000000e+00> : vector<8x32xf32>
    %5 = tpu.matmul %3, %4, %cst_7 {dimension_numbers = #tpu.dot_dimension_numbers<[1], [0], [0], [1], [0, 0, 1, 1], [], []>} : vector<8x32xf32>, vector<32x32xf32>, vector<8x32xf32> -> vector<8x32xf32>
    %6 = arith.addf %2, %5 : vector<8x32xf32>
    %c0_8 = arith.constant 0 : index
    %c0_9 = arith.constant 0 : index
    %7 = vector.load %arg3[%c0_8, %c0_9] : memref<8x16xf32, #tpu.memory_space<vmem>>, vector<8x16xf32>
    %c0_10 = arith.constant 0 : index
    %c0_11 = arith.constant 0 : index
    %8 = vector.load %arg6[%c0_10, %c0_11] : memref<16x32xf32, #tpu.memory_space<vmem>>, vector<16x32xf32>
    %cst_12 = arith.constant dense<0.000000e+00> : vector<8x32xf32>
    %9 = tpu.matmul %7, %8, %cst_12 {dimension_numbers = #tpu.dot_dimension_numbers<[1], [0], [0], [1], [0, 0, 1, 1], [], []>} : vector<8x16xf32>, vector<16x32xf32>, vector<8x32xf32> -> vector<8x32xf32>
    %10 = arith.addf %6, %9 : vector<8x32xf32>
    %11 = math.tanh %10 : vector<8x32xf32>
    %c0_13 = arith.constant 0 : index
    %c0_14 = arith.constant 0 : index
    %12 = vector.load %arg7[%c0_13, %c0_14] : memref<1x32xf32, #tpu.memory_space<vmem>>, vector<1x32xf32>
    %13 = vector.broadcast %12 : vector<1x32xf32> to vector<8x32xf32>
    %14 = arith.mulf %11, %13 : vector<8x32xf32>
    %15 = tpu.transpose %14, [1, 0] : vector<8x32xf32> -> vector<32x8xf32>
    %cst_15 = arith.constant dense<0.000000e+00> : vector<8xf32>
    %16 = vector.multi_reduction <add>, %15, %cst_15 [0] : vector<32x8xf32> to vector<8xf32>
    %17 = vector.shape_cast %16 : vector<8xf32> to vector<1x8xf32>
    %c0_16 = arith.constant 0 : index
    %c0_17 = arith.constant 0 : index
    %18 = vector.load %arg8[%c0_16, %c0_17] : memref<1x8xf32, #tpu.memory_space<vmem>>, vector<1x8xf32>
    tpu.vector_store %arg8[%c0_16, %c0_17], %17 {strides = array<i32>} : memref<1x8xf32, #tpu.memory_space<vmem>>, vector<1x8xf32>,
    return
  }
  func.func @transform_0(%arg0: i32) -> (i32, i32) {
    %c0_i32 = arith.constant 0 : i32
    %c0_i32_0 = arith.constant 0 : i32
    return %arg0, %c0_i32 : i32, i32
  }
  func.func @transform_1(%arg0: i32) -> (i32, i32) {
    %c0_i32 = arith.constant 0 : i32
    %c0_i32_0 = arith.constant 0 : i32
    return %arg0, %c0_i32 : i32, i32
  }
  func.func @transform_2(%arg0: i32) -> (i32, i32) {
    %c0_i32 = arith.constant 0 : i32
    %c0_i32_0 = arith.constant 0 : i32
    return %arg0, %c0_i32 : i32, i32
  }
  func.func @transform_3(%arg0: i32) -> (i32, i32) {
    %c0_i32 = arith.constant 0 : i32
    %c0_i32_0 = arith.constant 0 : i32
    %c0_i32_1 = arith.constant 0 : i32
    return %c0_i32, %c0_i32_0 : i32, i32
  }
  func.func @transform_4(%arg0: i32) -> (i32, i32) {
    %c0_i32 = arith.constant 0 : i32
    %c0_i32_0 = arith.constant 0 : i32
    %c0_i32_1 = arith.constant 0 : i32
    return %c0_i32, %c0_i32_0 : i32, i32
  }
  func.func @transform_5(%arg0: i32) -> (i32, i32) {
    %c0_i32 = arith.constant 0 : i32
    %c0_i32_0 = arith.constant 0 : i32
    %c0_i32_1 = arith.constant 0 : i32
    return %c0_i32, %c0_i32_0 : i32, i32
  }
  func.func @transform_6(%arg0: i32) -> (i32, i32) {
    %c0_i32 = arith.constant 0 : i32
    %c0_i32_0 = arith.constant 0 : i32
    %c0_i32_1 = arith.constant 0 : i32
    return %c0_i32, %c0_i32_0 : i32, i32
  }
  func.func @transform_7(%arg0: i32) -> (i32, i32) {
    %c0_i32 = arith.constant 0 : i32
    %c0_i32_0 = arith.constant 0 : i32
    return %c0_i32, %arg0 : i32, i32
  }
}

</mosaic_0001>

<llo_original>
// kernel: tpu_custom_call.1
$region0: #{tpu_custom_call.1}
  #allocation0 [shape = 'u32[]', space=smem, size = 0x4, offset = 0x4, fixed_abs, tag = 'smem constant byte address 0x4 - core index']
  #allocation1 [shape = 'u32[144,128]{1,0:T(1,128)}', space=vmem, size = 0x12000, scoped, tag = 'internal scratch']
  %s0 = inlined_call_operand.hbm [shape: f32[8,16], index: 0, kind: input, shape index: {}]
  %s1 = inlined_call_operand.hbm [shape: f32[8,32], index: 1, kind: input, shape index: {}]
  %s2 = inlined_call_operand.hbm [shape: f32[8,16], index: 2, kind: input, shape index: {}]
  %s3 = inlined_call_operand.hbm [shape: f32[16,32], index: 3, kind: input, shape index: {}]
  %s4 = inlined_call_operand.hbm [shape: f32[32,32], index: 4, kind: input, shape index: {}]
  %s5 = inlined_call_operand.hbm [shape: f32[16,32], index: 5, kind: input, shape index: {}]
  %s6 = inlined_call_operand.vmem [shape: f32[1,32], index: 6, kind: input, shape index: {}]
  %s7 = inlined_call_operand.hbm [shape: f32[1,8], index: 7, kind: output, shape index: {}]
  %s8 = sld [smem:[#allocation0]]
  $region62: #{tpu_custom_call.1} parent=0
    _
  %s10 = ssub.s32 1, %s8
  %s11 = scalar_select 0, %s10, %s8
  $region1: #{tpu_custom_call.1} parent=0
    #allocation2 [shape = 'u8[4096]{0}', space=vmem, size = 0x1000, scoped, tag = 'input window, operand 0, single buffered']
    #allocation3 [shape = 's32[1]{0}', space=sflag, size = 0x4, scoped, tag = 'scoped memory for tpu_custom_call.1']
    #allocation4 [shape = 's32[1]{0}', space=sflag, size = 0x4, scoped, tag = 'scoped memory for tpu_custom_call.1']
    #allocation5 [shape = 'u8[4096]{0}', space=vmem, size = 0x1000, scoped, tag = 'input window, operand 1, single buffered']
    #allocation6 [shape = 's32[1]{0}', space=sflag, size = 0x4, scoped, tag = 'scoped memory for tpu_custom_call.1']
    #allocation7 [shape = 'u8[4096]{0}', space=vmem, size = 0x1000, scoped, tag = 'input window, operand 2, single buffered']
    #allocation8 [shape = 'u8[8192]{0}', space=vmem, size = 0x2000, scoped, tag = 'input window, operand 3, single buffered']
    #allocation9 [shape = 's32[1]{0}', space=sflag, size = 0x4, scoped, tag = 'scoped memory for tpu_custom_call.1']
    #allocation10 [shape = 'u8[16384]{0}', space=vmem, size = 0x4000, scoped, tag = 'input window, operand 4, single buffered']
    #allocation11 [shape = 'u8[8192]{0}', space=vmem, size = 0x2000, scoped, tag = 'input window, operand 5, single buffered']
    #allocation12 [shape = 's32[1]{0}', space=sflag, size = 0x4, scoped, tag = 'scoped memory for tpu_custom_call.1']
    #allocation13 [shape = 'u8[512]{0}', space=vmem, size = 0x400, scoped, tag = 'output window, operand 0, single buffered']
    %12 = vsyncpa [#allocation3], 0
    %13 = vsyncpa [#allocation6], 0
    %14 = vsyncpa [#allocation9], 0
    %15 = vsyncpa [#allocation12], 0
    %16 = vsyncpa [#allocation4], 0
    // Predicated region
    $region2: #{tpu_custom_call.1} parent=1 // pred_check
      _
    $region3: #{tpu_custom_call.1} parent=1 // pred_check_branch
      %18 = sbr.rel (0) target = $region5
    $region4: #{tpu_custom_call.1} parent=1 // pred_region
      %s20 = ssub.s32 128, 128
      %21 = vsyncadd [#allocation3], %s20
      %s23 = sshll.u32 [#allocation2], 4
      %s24 = int_to_ptr.vmem [resolvable:$true] %s23
      %26 = dma.hbm_to_vmem [thread:$0]  %s0, 128, %s24, [#allocation3]
    $region5: #{tpu_custom_call.1} parent=1 // pred_fallthru
      _
    // Predicated region
    $region6: #{tpu_custom_call.1} parent=1 // pred_check
      _
    $region7: #{tpu_custom_call.1} parent=1 // pred_check_branch
      %28 = sbr.rel (0) target = $region9
    $region8: #{tpu_custom_call.1} parent=1 // pred_region
      %s30 = ssub.s32 128, 128
      %31 = vsyncadd [#allocation6], %s30
      %s33 = sshll.u32 [#allocation5], 4
      %s34 = int_to_ptr.vmem [resolvable:$true] %s33
      %36 = dma.hbm_to_vmem [thread:$0]  %s1, 128, %s34, [#allocation6]
    $region9: #{tpu_custom_call.1} parent=1 // pred_fallthru
      _
    // Predicated region
    $region10: #{tpu_custom_call.1} parent=1 // pred_check
      _
    $region11: #{tpu_custom_call.1} parent=1 // pred_check_branch
      %38 = sbr.rel (0) target = $region13
    $region12: #{tpu_custom_call.1} parent=1 // pred_region
      %s40 = ssub.s32 128, 128
      %41 = vsyncadd [#allocation6], %s40
      %s43 = sshll.u32 [#allocation7], 4
      %s44 = int_to_ptr.vmem [resolvable:$true] %s43
      %46 = dma.hbm_to_vmem [thread:$0]  %s2, 128, %s44, [#allocation6]
    $region13: #{tpu_custom_call.1} parent=1 // pred_fallthru
      _
    // Predicated region
    $region14: #{tpu_custom_call.1} parent=1 // pred_check
      _
    $region15: #{tpu_custom_call.1} parent=1 // pred_check_branch
      %48 = sbr.rel (0) target = $region17
    $region16: #{tpu_custom_call.1} parent=1 // pred_region
      %s50 = ssub.s32 256, 256
      %51 = vsyncadd [#allocation9], %s50
      %s52 = sshll.u32 [#allocation8], 4
      %s53 = int_to_ptr.vmem [resolvable:$true] %s52
      %58 = dma.hbm_to_vmem [thread:$0]  %s3, 256, %s53, [#allocation9], 128, 128, 8
    $region17: #{tpu_custom_call.1} parent=1 // pred_fallthru
      _
    // Predicated region
    $region18: #{tpu_custom_call.1} parent=1 // pred_check
      _
    $region19: #{tpu_custom_call.1} parent=1 // pred_check_branch
      %60 = sbr.rel (0) target = $region21
    $region20: #{tpu_custom_call.1} parent=1 // pred_region
      %s62 = ssub.s32 512, 512
      %63 = vsyncadd [#allocation9], %s62
      %s64 = sshll.u32 [#allocation10], 4
      %s65 = int_to_ptr.vmem [resolvable:$true] %s64
      %70 = dma.hbm_to_vmem [thread:$0]  %s4, 512, %s65, [#allocation9], 128, 128, 8
    $region21: #{tpu_custom_call.1} parent=1 // pred_fallthru
      _
    // Predicated region
    $region22: #{tpu_custom_call.1} parent=1 // pred_check
      _
    $region23: #{tpu_custom_call.1} parent=1 // pred_check_branch
      %72 = sbr.rel (0) target = $region25
    $region24: #{tpu_custom_call.1} parent=1 // pred_region
      %s74 = ssub.s32 256, 256
      %75 = vsyncadd [#allocation12], %s74
      %s76 = sshll.u32 [#allocation11], 4
      %s77 = int_to_ptr.vmem [resolvable:$true] %s76
      %82 = dma.hbm_to_vmem [thread:$0]  %s5, 256, %s77, [#allocation12], 128, 128, 8
    $region25: #{tpu_custom_call.1} parent=1 // pred_fallthru
      _
    // Predicated region
    $region26: #{tpu_custom_call.1} parent=1 // pred_check
      _
    $region27: #{tpu_custom_call.1} parent=1 // pred_check_branch
      %84 = sbr.rel (0) target = $region29
    $region28: #{tpu_custom_call.1} parent=1 // pred_region
      _
    $region29: #{tpu_custom_call.1} parent=1 // pred_fallthru
      _
    // Predicated region
    $region30: #{tpu_custom_call.1} parent=1 // pred_check
      _
    $region31: #{tpu_custom_call.1} parent=1 // pred_check_branch
      %86 = sbr.rel (0) target = $region33
    $region32: #{tpu_custom_call.1} parent=1 // pred_region
      %87 = dma.done [#allocation3], 128
    $region33: #{tpu_custom_call.1} parent=1 // pred_fallthru
      _
    // Predicated region
    $region34: #{tpu_custom_call.1} parent=1 // pred_check
      _
    $region35: #{tpu_custom_call.1} parent=1 // pred_check_branch
      %89 = sbr.rel (0) target = $region37
    $region36: #{tpu_custom_call.1} parent=1 // pred_region
      %90 = dma.done [#allocation6], 128
    $region37: #{tpu_custom_call.1} parent=1 // pred_fallthru
      _
    // Predicated region
    $region38: #{tpu_custom_call.1} parent=1 // pred_check
      _
    $region39: #{tpu_custom_call.1} parent=1 // pred_check_branch
      %92 = sbr.rel (0) target = $region41
    $region40: #{tpu_custom_call.1} parent=1 // pred_region
      %93 = dma.done [#allocation6], 128
    $region41: #{tpu_custom_call.1} parent=1 // pred_fallthru
      _
    // Predicated region
    $region42: #{tpu_custom_call.1} parent=1 // pred_check
      _
    $region43: #{tpu_custom_call.1} parent=1 // pred_check_branch
      %95 = sbr.rel (0) target = $region45
    $region44: #{tpu_custom_call.1} parent=1 // pred_region
      %96 = dma.done [#allocation9], 256
    $region45: #{tpu_custom_call.1} parent=1 // pred_fallthru
      _
    // Predicated region
    $region46: #{tpu_custom_call.1} parent=1 // pred_check
      _
    $region47: #{tpu_custom_call.1} parent=1 // pred_check_branch
      %98 = sbr.rel (0) target = $region49
    $region48: #{tpu_custom_call.1} parent=1 // pred_region
      %99 = dma.done [#allocation9], 512
    $region49: #{tpu_custom_call.1} parent=1 // pred_fallthru
      _
    // Predicated region
    $region50: #{tpu_custom_call.1} parent=1 // pred_check
      _
    $region51: #{tpu_custom_call.1} parent=1 // pred_check_branch
      %101 = sbr.rel (0) target = $region53
    $region52: #{tpu_custom_call.1} parent=1 // pred_region
      %102 = dma.done [#allocation12], 256
    $region53: #{tpu_custom_call.1} parent=1 // pred_fallthru
      _
    %v103 = vld [vmem:[#allocation2] sm:$0xff]
    %v104 = vld [vmem:[#allocation8] sm:$0xff]
    %v105 = vld [vmem:[#allocation8 + $0x8] sm:$0xff]
    %v106 = vld [vmem:[#allocation5] sm:$0xff]
    %v107 = vld [vmem:[#allocation10] sm:$0xff]
    %v108 = vld [vmem:[#allocation10 + $0x8] sm:$0xff]
    %v109 = vld [vmem:[#allocation10 + $0x10] sm:$0xff]
    %v110 = vld [vmem:[#allocation10 + $0x18] sm:$0xff]
    %vm111 = vcmask 261120
    %v113 = vsel %vm111, %v106, 0
    %115 = vmatprep.subr.mxu0 0.0
    %116 = vmatpush1.msra.mxu0 0.0
    %117 = vmatprep.subr.mxu0 0.0
    %118 = vmatpush1.msra.mxu0 0.0
    %119 = vmatprep.subr.mxu0 0.0
    %120 = vmatpush1.msra.mxu0 0.0
    %121 = vmatprep.subr.mxu0 0.0
    %122 = vmatpush1.msra.mxu0 0.0
    %123 = vmatprep.subr.mxu0 0.0
    %124 = vmatpush1.msra.mxu0 0.0
    %125 = vmatprep.subr.mxu0 0.0
    %126 = vmatpush1.msra.mxu0 0.0
    %127 = vmatprep.subr.mxu0 0.0
    %128 = vmatpush1.msra.mxu0 0.0
    %129 = vmatprep.subr.mxu0 0.0
    %130 = vmatpush1.msra.mxu0 0.0
    %131 = vmatprep.subr.mxu0 0.0
    %132 = vmatpush1.msra.mxu0 0.0
    %133 = vmatprep.subr.mxu0 0.0
    %134 = vmatpush1.msra.mxu0 0.0
    %135 = vmatprep.subr.mxu0 0.0
    %136 = vmatpush1.msra.mxu0 0.0
    %137 = vmatprep.subr.mxu0 0.0
    %138 = vmatpush1.msra.mxu0 0.0
    %139 = vmatprep.subr.mxu0 0.0
    %140 = vmatpush1.msra.mxu0 %v110
    %141 = vmatprep.subr.mxu0 0.0
    %142 = vmatpush1.msra.mxu0 %v109
    %143 = vmatprep.subr.mxu0 0.0
    %144 = vmatpush1.msra.mxu0 %v108
    %145 = vmatprep.subr.mxu0 0.0
    %146 = vmatpush1.msra.mxu0 %v107
    %147 = vmatprep.subr.mxu0 0.0
    %148 = vmatpush2.msra.mxu0 0.0
    %149 = vmatprep.subr.mxu0 0.0
    %150 = vmatpush2.msra.mxu0 0.0
    %151 = vmatprep.subr.mxu0 0.0
    %152 = vmatpush2.msra.mxu0 0.0
    %153 = vmatprep.subr.mxu0 0.0
    %154 = vmatpush2.msra.mxu0 0.0
    %155 = vmatprep.subr.mxu0 0.0
    %156 = vmatpush2.msra.mxu0 0.0
    %157 = vmatprep.subr.mxu0 0.0
    %158 = vmatpush2.msra.mxu0 0.0
    %159 = vmatprep.subr.mxu0 0.0
    %160 = vmatpush2.msra.mxu0 0.0
    %161 = vmatprep.subr.mxu0 0.0
    %162 = vmatpush2.msra.mxu0 0.0
    %163 = vmatprep.subr.mxu0 0.0
    %164 = vmatpush2.msra.mxu0 0.0
    %165 = vmatprep.subr.mxu0 0.0
    %166 = vmatpush2.msra.mxu0 0.0
    %167 = vmatprep.subr.mxu0 0.0
    %168 = vmatpush2.msra.mxu0 0.0
    %169 = vmatprep.subr.mxu0 0.0
    %170 = vmatpush2.msra.mxu0 0.0
    %171 = vmatprep.subr.mxu0 0.0
    %172 = vmatpush2.msra.mxu0 0.0
    %173 = vmatprep.subr.mxu0 0.0
    %174 = vmatpush2.msra.mxu0 0.0
    %175 = vmatprep.subr.mxu0 0.0
    %176 = vmatpush2.msra.mxu0 0.0
    %177 = vmatprep.subr.mxu0 0.0
    %178 = vmatpush2.msra.mxu0 0.0
    %179 = vmatprep.mubr.f32.mxu0 0.0
    %180 = vmatmul.mubr.f32.gmra.mxu0 %v113
    %v181 = vpop.f32.mrf.mxu0
    %v182 = vadd.f32 0.0, %v181
    %v183 = vpop.f32.mrf.mxu0
    %184 = vdwg.mxu0
    %vm185 = vcmask 130048
    %v187 = vsel %vm185, %v103, 0
    %189 = vmatprep.subr.mxu0 0.0
    %190 = vmatpush1.msra.mxu0 0.0
    %191 = vmatprep.subr.mxu0 0.0
    %192 = vmatpush1.msra.mxu0 0.0
    %193 = vmatprep.subr.mxu0 0.0
    %194 = vmatpush1.msra.mxu0 0.0
    %195 = vmatprep.subr.mxu0 0.0
    %196 = vmatpush1.msra.mxu0 0.0
    %197 = vmatprep.subr.mxu0 0.0
    %198 = vmatpush1.msra.mxu0 0.0
    %199 = vmatprep.subr.mxu0 0.0
    %200 = vmatpush1.msra.mxu0 0.0
    %201 = vmatprep.subr.mxu0 0.0
    %202 = vmatpush1.msra.mxu0 0.0
    %203 = vmatprep.subr.mxu0 0.0
    %204 = vmatpush1.msra.mxu0 0.0
    %205 = vmatprep.subr.mxu0 0.0
    %206 = vmatpush1.msra.mxu0 0.0
    %207 = vmatprep.subr.mxu0 0.0
    %208 = vmatpush1.msra.mxu0 0.0
    %209 = vmatprep.subr.mxu0 0.0
    %210 = vmatpush1.msra.mxu0 0.0
    %211 = vmatprep.subr.mxu0 0.0
    %212 = vmatpush1.msra.mxu0 0.0
    %213 = vmatprep.subr.mxu0 0.0
    %214 = vmatpush1.msra.mxu0 0.0
    %215 = vmatprep.subr.mxu0 0.0
    %216 = vmatpush1.msra.mxu0 0.0
    %217 = vmatprep.subr.mxu0 0.0
    %218 = vmatpush1.msra.mxu0 %v105
    %219 = vmatprep.subr.mxu0 0.0
    %220 = vmatpush1.msra.mxu0 %v104
    %221 = vmatprep.subr.mxu0 0.0
    %222 = vmatpush2.msra.mxu0 0.0
    %223 = vmatprep.subr.mxu0 0.0
    %224 = vmatpush2.msra.mxu0 0.0
    %225 = vmatprep.subr.mxu0 0.0
    %226 = vmatpush2.msra.mxu0 0.0
    %227 = vmatprep.subr.mxu0 0.0
    %228 = vmatpush2.msra.mxu0 0.0
    %229 = vmatprep.subr.mxu0 0.0
    %230 = vmatpush2.msra.mxu0 0.0
    %231 = vmatprep.subr.mxu0 0.0
    %232 = vmatpush2.msra.mxu0 0.0
    %233 = vmatprep.subr.mxu0 0.0
    %234 = vmatpush2.msra.mxu0 0.0
    %235 = vmatprep.subr.mxu0 0.0
    %236 = vmatpush2.msra.mxu0 0.0
    %237 = vmatprep.subr.mxu0 0.0
    %238 = vmatpush2.msra.mxu0 0.0
    %239 = vmatprep.subr.mxu0 0.0
    %240 = vmatpush2.msra.mxu0 0.0
    %241 = vmatprep.subr.mxu0 0.0
    %242 = vmatpush2.msra.mxu0 0.0
    %243 = vmatprep.subr.mxu0 0.0
    %244 = vmatpush2.msra.mxu0 0.0
    %245 = vmatprep.subr.mxu0 0.0
    %246 = vmatpush2.msra.mxu0 0.0
    %247 = vmatprep.subr.mxu0 0.0
    %248 = vmatpush2.msra.mxu0 0.0
    %249 = vmatprep.subr.mxu0 0.0
    %250 = vmatpush2.msra.mxu0 0.0
    %251 = vmatprep.subr.mxu0 0.0
    %252 = vmatpush2.msra.mxu0 0.0
    %253 = vmatprep.mubr.f32.mxu0 0.0
    %254 = vmatmul.mubr.f32.gmra.mxu0 %v187
    %v255 = vpop.f32.mrf.mxu0
    %v256 = vadd.f32 %v182, %v255
    %v257 = vpop.f32.mrf.mxu0
    %258 = vdwg.mxu0
    %v259 = vld [vmem:[#allocation7] sm:$0xff]
    %v260 = vld [vmem:[#allocation11] sm:$0xff]
    %v261 = vld [vmem:[#allocation11 + $0x8] sm:$0xff]
    %v263 = vsel %vm185, %v259, 0
    %265 = vmatprep.subr.mxu0 0.0
    %266 = vmatpush1.msra.mxu0 0.0
    %267 = vmatprep.subr.mxu0 0.0
    %268 = vmatpush1.msra.mxu0 0.0
    %269 = vmatprep.subr.mxu0 0.0
    %270 = vmatpush1.msra.mxu0 0.0
    %271 = vmatprep.subr.mxu0 0.0
    %272 = vmatpush1.msra.mxu0 0.0
    %273 = vmatprep.subr.mxu0 0.0
    %274 = vmatpush1.msra.mxu0 0.0
    %275 = vmatprep.subr.mxu0 0.0
    %276 = vmatpush1.msra.mxu0 0.0
    %277 = vmatprep.subr.mxu0 0.0
    %278 = vmatpush1.msra.mxu0 0.0
    %279 = vmatprep.subr.mxu0 0.0
    %280 = vmatpush1.msra.mxu0 0.0
    %281 = vmatprep.subr.mxu0 0.0
    %282 = vmatpush1.msra.mxu0 0.0
    %283 = vmatprep.subr.mxu0 0.0
    %284 = vmatpush1.msra.mxu0 0.0
    %285 = vmatprep.subr.mxu0 0.0
    %286 = vmatpush1.msra.mxu0 0.0
    %287 = vmatprep.subr.mxu0 0.0
    %288 = vmatpush1.msra.mxu0 0.0
    %289 = vmatprep.subr.mxu0 0.0
    %290 = vmatpush1.msra.mxu0 0.0
    %291 = vmatprep.subr.mxu0 0.0
    %292 = vmatpush1.msra.mxu0 0.0
    %293 = vmatprep.subr.mxu0 0.0
    %294 = vmatpush1.msra.mxu0 %v261
    %295 = vmatprep.subr.mxu0 0.0
    %296 = vmatpush1.msra.mxu0 %v260
    %297 = vmatprep.subr.mxu0 0.0
    %298 = vmatpush2.msra.mxu0 0.0
    %299 = vmatprep.subr.mxu0 0.0
    %300 = vmatpush2.msra.mxu0 0.0
    %301 = vmatprep.subr.mxu0 0.0
    %302 = vmatpush2.msra.mxu0 0.0
    %303 = vmatprep.subr.mxu0 0.0
    %304 = vmatpush2.msra.mxu0 0.0
    %305 = vmatprep.subr.mxu0 0.0
    %306 = vmatpush2.msra.mxu0 0.0
    %307 = vmatprep.subr.mxu0 0.0
    %308 = vmatpush2.msra.mxu0 0.0
    %309 = vmatprep.subr.mxu0 0.0
    %310 = vmatpush2.msra.mxu0 0.0
    %311 = vmatprep.subr.mxu0 0.0
    %312 = vmatpush2.msra.mxu0 0.0
    %313 = vmatprep.subr.mxu0 0.0
    %314 = vmatpush2.msra.mxu0 0.0
    %315 = vmatprep.subr.mxu0 0.0
    %316 = vmatpush2.msra.mxu0 0.0
    %317 = vmatprep.subr.mxu0 0.0
    %318 = vmatpush2.msra.mxu0 0.0
    %319 = vmatprep.subr.mxu0 0.0
    %320 = vmatpush2.msra.mxu0 0.0
    %321 = vmatprep.subr.mxu0 0.0
    %322 = vmatpush2.msra.mxu0 0.0
    %323 = vmatprep.subr.mxu0 0.0
    %324 = vmatpush2.msra.mxu0 0.0
    %325 = vmatprep.subr.mxu0 0.0
    %326 = vmatpush2.msra.mxu0 0.0
    %327 = vmatprep.subr.mxu0 0.0
    %328 = vmatpush2.msra.mxu0 0.0
    %329 = vmatprep.mubr.f32.mxu0 0.0
    %330 = vmatmul.mubr.f32.gmra.mxu0 %v263
    %v331 = vpop.f32.mrf.mxu0
    %v332 = vadd.f32 0.0, %v331
    %v333 = vpop.f32.mrf.mxu0
    %334 = vdwg.mxu0
    %v335 = vadd.f32 %v256, %v332
    %v336 = vtanh.pop %v335
    %v337 = vld [vmem:[%s6] sm:$0x1]
    %v339 = vlaneseq
    %v340 = vshrl.u32 %v339, 7
    %v341 = vsub.s32 0, %v340
    %v342 = vrot.slane %v337, %v341
    %v344 = vmul.f32 %v336, %v342
    %345 = vxpose.xlu0.b32.start [1/16] %v344, 128
    %346 = vxpose.xlu0.b32.cont [2/16] 0.0, 128
    %347 = vxpose.xlu0.b32.cont [3/16] 0.0, 128
    %348 = vxpose.xlu0.b32.cont [4/16] 0.0, 128
    %349 = vxpose.xlu0.b32.cont [5/16] 0.0, 128
    %350 = vxpose.xlu0.b32.cont [6/16] 0.0, 128
    %351 = vxpose.xlu0.b32.cont [7/16] 0.0, 128
    %352 = vxpose.xlu0.b32.cont [8/16] 0.0, 128
    %353 = vxpose.xlu0.b32.cont [9/16] 0.0, 128
    %354 = vxpose.xlu0.b32.cont [10/16] 0.0, 128
    %355 = vxpose.xlu0.b32.cont [11/16] 0.0, 128
    %356 = vxpose.xlu0.b32.cont [12/16] 0.0, 128
    %357 = vxpose.xlu0.b32.cont [13/16] 0.0, 128
    %358 = vxpose.xlu0.b32.cont [14/16] 0.0, 128
    %359 = vxpose.xlu0.b32.cont [15/16] 0.0, 128
    %360 = vxpose.xlu0.b32.end [16/16] 0.0, 128
    %v361 = vpop.trf.xlu0
    %v362 = vpop.trf.xlu0
    %v363 = vpop.trf.xlu0
    %v364 = vpop.trf.xlu0
    %v365 = vpop.trf.xlu0
    %v366 = vpop.trf.xlu0
    %v367 = vpop.trf.xlu0
    %v368 = vpop.trf.xlu0
    %v369 = vpop.trf.xlu0
    %v370 = vpop.trf.xlu0
    %v371 = vpop.trf.xlu0
    %v372 = vpop.trf.xlu0
    %v373 = vpop.trf.xlu0
    %v374 = vpop.trf.xlu0
    %v375 = vpop.trf.xlu0
    %v376 = vpop.trf.xlu0
    %vm377 = vcmask 64512
    %v378 = vsel %vm377, %v361, 0.0
    %v379 = vsel %vm377, %v362, 0.0
    %v380 = vadd.f32 %v378, %v379
    %v381 = vsel %vm377, %v363, 0.0
    %v382 = vadd.f32 %v380, %v381
    %v383 = vsel %vm377, %v364, 0.0
    %v384 = vadd.f32 %v382, %v383
    %v385 = vrot.slane %v384, 4
    %v386 = vadd.f32 %v384, %v385
    %v387 = vrot.slane %v386, 2
    %v388 = vadd.f32 %v386, %v387
    %v389 = vrot.slane %v388, 1
    %v390 = vadd.f32 %v388, %v389
    %vm391 = vcmask 57344
    %392 = vst.msk [vmem:[#allocation13] sm:$0x1] %vm391, %v390
    // Predicated region
    $region54: #{tpu_custom_call.1} parent=1 // pred_check
      _
    $region55: #{tpu_custom_call.1} parent=1 // pred_check_branch
      %394 = sbr.rel (0) target = $region57
    $region56: #{tpu_custom_call.1} parent=1 // pred_region
      %s396 = ssub.s32 16, 16
      %397 = vsyncadd [#allocation4], %s396
      %s399 = sshll.u32 [#allocation13], 4
      %s400 = int_to_ptr.vmem [resolvable:$true] %s399
      %402 = dma.vmem_to_hbm [thread:$0]  %s400, 16, %s7, [#allocation4]
    $region57: #{tpu_custom_call.1} parent=1 // pred_fallthru
      _
    // Predicated region
    $region58: #{tpu_custom_call.1} parent=1 // pred_check
      _
    $region59: #{tpu_custom_call.1} parent=1 // pred_check_branch
      %404 = sbr.rel (0) target = $region61
    $region60: #{tpu_custom_call.1} parent=1 // pred_region
      %405 = dma.done [#allocation4], 16
    $region61: #{tpu_custom_call.1} parent=1 // pred_fallthru
      _
    %406 = vsyncpa [#allocation3], 1
    %407 = vsyncpa [#allocation6], 1
    %408 = vsyncpa [#allocation9], 1
    %409 = vsyncpa [#allocation12], 1
    %410 = vsyncpa [#allocation4], 1

</llo_original>
